<compile_context>
chip_gen: v5e
topology: v5e:2x2
jax: 0.10.0
libtpu: 0.0.40
codegen_flags: <defaults>
</compile_context>

<pallas_src>
import functools

import numpy as np
import jax
import jax.numpy as jnp
from jax import lax
from jax.experimental import pallas as pl
from jax.experimental.pallas import tpu as pltpu

EPS = 1e-12  # module uses TF-style LayerNorm(50, eps=1e-12)


def _freq_layer_kernel(x_ref, p_ref, par_ref, o_ref, *, h_true):
    # x_ref  : (bc, S, Hp) input tile, native dtype (Hp = H padded to 128).
    # p_ref  : (S, S)      low-pass operator (f32, grid-invariant).
    # par_ref: (4, Hp)     rows = [1-beta^2, 1+beta^2, ln_weight, ln_bias] (f32).
    # o_ref  : (bc, S, Hp) output tile.
    x_in = x_ref[...]
    bc, s, hp = x_in.shape

    # low[b] = P @ x[b]  — batched matmul, P broadcast over the batch dim.
    p = p_ref[...].astype(x_in.dtype)
    pb = jnp.broadcast_to(p[None], (bc, s, s))
    low = lax.dot_general(
        pb, x_in,
        dimension_numbers=(((2,), (1,)), ((0,), (0,))),
        preferred_element_type=jnp.float32,
    )                                                       # (bc, S, Hp) f32

    x = x_in.astype(jnp.float32)
    par = par_ref[...]                                      # (4, Hp) f32
    coef_low = par[0:1][None]                               # (1, 1, Hp)
    coef_x = par[1:2][None]
    w = par[2:3][None]
    b = par[3:4][None]

    # low + beta^2*(x-low) + x  ==  (1-beta^2)*low + (1+beta^2)*x
    # (dropout(0.5) in eval mode == identity; residual already folded in)
    # Padded hidden lanes of x and low are zero -> y padded lanes are zero.
    y = coef_low * low + coef_x * x                         # (bc, S, Hp)

    # TF-style LayerNorm over the TRUE hidden dim (biased variance).
    inv_h = 1.0 / h_true
    u = jnp.sum(y, axis=-1, keepdims=True) * inv_h          # padded lanes sum to 0
    d = y - u
    lane = lax.broadcasted_iota(jnp.int32, (1, 1, hp), 2)
    dm = jnp.where(lane < h_true, d, 0.0)                   # mask pad for variance
    s_var = jnp.sum(dm * dm, axis=-1, keepdims=True) * inv_h
    yn = d * lax.rsqrt(s_var + EPS)                         # single EUP op
    # Padded lanes of w and b are zero -> padded output lanes are exactly 0.
    o_ref[...] = (w * yn + b).astype(o_ref.dtype)


@functools.lru_cache(maxsize=None)
def _lowpass_matrix(seq_len: int, c: int) -> np.ndarray:
    """(S, S) operator: P @ x == irfft(rfft(x) with freq indices >= c zeroed).

    Computed with numpy at trace time -> compile-time constant (no device FFT).
    `c` must be a static Python int (it is an __init__ arg of the module).
    """
    eye = np.eye(seq_len, dtype=np.float64)
    spec = np.fft.rfft(eye, axis=0, norm="ortho")            # (S//2+1, S)
    spec[c:, :] = 0.0
    p = np.fft.irfft(spec, n=seq_len, axis=0, norm="ortho")  # (S, S)
    return p.astype(np.float32)


def _pick_block_batch(batch, seq, hp, itemsize, target_bytes=2 << 20):
    """Largest divisor of `batch` whose (bc*S, Hp) tile is ~<= target_bytes."""
    target_rows = max(seq, target_bytes // max(1, hp * itemsize))
    bc = 1
    for d in range(1, batch + 1):
        if batch % d == 0 and d * seq <= target_rows:
            bc = d
    return bc


def frequency_layer(x, c, beta, ln_weight, ln_bias, *, block_batch=None):
    """x: (B, S, H). Returns (B, S, H) in x.dtype.

    block_batch: batch elements per grid step (must divide B). Default: auto,
    sized so each in/out tile is ~2 MiB -> pipelined multi-step grid at
    realistic batch sizes, collapsing only when the whole problem is tiny.
    """
    B, S, H = x.shape
    Hp = max(128, ((H + 127) // 128) * 128)                  # lane-dense last dim
    itemsize = jnp.dtype(x.dtype).itemsize

    if block_batch is None:
        bc = _pick_block_batch(B, S, Hp, itemsize)
    else:
        bc = int(block_batch)
        assert B % bc == 0, "block_batch must divide batch"
    grid_steps = B // bc

    # Trace-time constant (S, S) low-pass operator — NOT block-diagonal.
    p_mat = jnp.asarray(_lowpass_matrix(int(S), int(c)))     # (S, S) f32

    # Fuse the four per-hidden vectors into one (4, Hp) resident operand.
    beta2 = jnp.square(beta.reshape(-1)[:H].astype(jnp.float32))

    def _pad_h(v):
        return jnp.pad(v.astype(jnp.float32).reshape(-1)[:H], (0, Hp - H))

    params = jnp.stack(
        [_pad_h(1.0 - beta2), _pad_h(1.0 + beta2),
         _pad_h(ln_weight), _pad_h(ln_bias)], axis=0)         # (4, Hp)

    # Zero-pad hidden to Hp in the input's NATIVE dtype (no f32 upcast in HBM).
    x_p = jnp.pad(x, ((0, 0), (0, 0), (0, Hp - H)))

    # VMEM budget from the actual requirement (double-buffered in/out tiles,
    # f32 temporaries, resident constants), clamped below v7x's 64 MiB/TC.
    in_bytes = bc * S * Hp * itemsize
    out_bytes = bc * S * Hp * itemsize
    tmp_bytes = 6 * bc * S * Hp * 4
    const_bytes = (S * 128 + 8 * Hp) * 4
    vmem_limit = int(min(max(2 * (in_bytes + out_bytes) + tmp_bytes
                             + 2 * const_bytes + (1 << 20), 8 << 20), 48 << 20))

    kern = functools.partial(_freq_layer_kernel, h_true=int(H))

    out_p = pl.pallas_call(
        kern,
        out_shape=jax.ShapeDtypeStruct((B, S, Hp), x.dtype),
        grid_spec=pltpu.PrefetchScalarGridSpec(
            num_scalar_prefetch=0,
            grid=(grid_steps,),
            in_specs=[
                pl.BlockSpec((bc, S, Hp), lambda i: (i, 0, 0)),  # x tile
                pl.BlockSpec((S, S), lambda i: (0, 0)),          # P (resident)
                pl.BlockSpec((4, Hp), lambda i: (0, 0)),         # fused params
            ],
            out_specs=pl.BlockSpec((bc, S, Hp), lambda i: (i, 0, 0)),
        ),
        compiler_params=pltpu.CompilerParams(
            dimension_semantics=("parallel",),
            vmem_limit_bytes=vmem_limit,
        ),
    )(x_p, p_mat, params)

    return out_p[:, :, :H]


def _reference(x, c, beta, ln_weight, ln_bias):
    """Pure-JAX reference mirroring the PyTorch forward (eval mode)."""
    B, S, H = x.shape
    spec = jnp.fft.rfft(x, axis=1, norm="ortho")
    n_freq = spec.shape[1]
    keep = (jnp.arange(n_freq) < c)[None, :, None]
    spec = jnp.where(keep, spec, 0.0 + 0.0j)
    low = jnp.fft.irfft(spec, n=S, axis=1, norm="ortho")
    high = x - low
    seq_emb = low + (beta.reshape(1, 1, H) ** 2) * high
    y = seq_emb + x
    u = y.mean(-1, keepdims=True)
    s = ((y - u) ** 2).mean(-1, keepdims=True)
    yn = (y - u) / jnp.sqrt(s + EPS)
    return ln_weight.reshape(1, 1, H) * yn + ln_bias.reshape(1, 1, H)


if __name__ == "__main__":
    key = jax.random.PRNGKey(0)
    B, S, H = 4, 8, 50          # hidden fixed to 50 by the module (LayerNorm(50))
    C = 3                        # cutoff frequency index (args)

    k_x, k_beta = jax.random.split(key)
    x = jax.random.normal(k_x, (B, S, H), dtype=jnp.float32)
    beta = jax.random.normal(k_beta, (1, 1, H), dtype=jnp.float32)  # randn(1,1,50)
    ln_weight = jnp.ones((H,), dtype=jnp.float32)
    ln_bias = jnp.zeros((H,), dtype=jnp.float32)

    ref = _reference(x, C, beta, ln_weight, ln_bias)

    # Auto tile sizing (toy problem fits one step; realistic B -> many steps).
    fwd = jax.jit(lambda xx, bb, ww, cc: frequency_layer(xx, C, bb, ww, cc))
    out = jax.block_until_ready(fwd(x, beta, ln_weight, ln_bias))
    assert out.shape == (B, S, H)
    assert jnp.allclose(out, ref, atol=1e-4, rtol=1e-4), "mismatch vs reference"

    # Explicit multi-step pipelined grid (grid=(B,)) — exercises the
    # double-buffered path and the per-core sharding on multi-TC chips.
    fwd2 = jax.jit(lambda xx, bb, ww, cc: frequency_layer(
        xx, C, bb, ww, cc, block_batch=1))
    out2 = jax.block_until_ready(fwd2(x, beta, ln_weight, ln_bias))
    assert jnp.allclose(out2, ref, atol=1e-4, rtol=1e-4), "mismatch (chunked)"

    print("KERNEL_OK")
</pallas_src>

<mosaic_0001>
module attributes {stable_mosaic.version = 11 : i64} {
  func.func @_freq_layer_kernel(%arg0: i32, %arg1: memref<4x8x128xf32, #tpu.memory_space<vmem>>, %arg2: memref<8x8xf32, #tpu.memory_space<vmem>>, %arg3: memref<4x128xf32, #tpu.memory_space<vmem>>, %arg4: memref<4x8x128xf32, #tpu.memory_space<vmem>>) attributes {dimension_semantics = [#tpu.dimension_semantics<parallel>], iteration_bounds = array<i64: 1>, scalar_prefetch = 0 : i64, scratch_operands = 0 : i64, tpu.core_type = #tpu.core_type<tc>, window_params = [{transform_indices = @transform_0, window_bounds = array<i64: 4, 8, 128>}, {pipeline_mode = #tpu.pipeline_mode<synchronous>, transform_indices = @transform_1, window_bounds = array<i64: 8, 8>}, {pipeline_mode = #tpu.pipeline_mode<synchronous>, transform_indices = @transform_2, window_bounds = array<i64: 4, 128>}, {transform_indices = @transform_3, window_bounds = array<i64: 4, 8, 128>}]} {
    %c0 = arith.constant 0 : index
    %c0_0 = arith.constant 0 : index
    %c0_1 = arith.constant 0 : index
    %0 = vector.load %arg1[%c0, %c0_0, %c0_1] : memref<4x8x128xf32, #tpu.memory_space<vmem>>, vector<4x8x128xf32>
    %c0_2 = arith.constant 0 : index
    %c0_3 = arith.constant 0 : index
    %1 = vector.load %arg2[%c0_2, %c0_3] : memref<8x8xf32, #tpu.memory_space<vmem>>, vector<8x8xf32>
    %2 = vector.shape_cast %1 : vector<8x8xf32> to vector<1x8x8xf32>
    %3 = vector.shape_cast %2 : vector<1x8x8xf32> to vector<1x8x8xf32>
    %4 = vector.broadcast %3 : vector<1x8x8xf32> to vector<4x8x8xf32>
    %cst = arith.constant dense<0.000000e+00> : vector<4x8x128xf32>
    %5 = tpu.matmul %4, %0, %cst {dimension_numbers = #tpu.dot_dimension_numbers<[2], [1], [1], [2], [0, 0, 0, 1, 1, 2], [0], [0]>} : vector<4x8x8xf32>, vector<4x8x128xf32>, vector<4x8x128xf32> -> vector<4x8x128xf32>
    %c0_4 = arith.constant 0 : index
    %c0_5 = arith.constant 0 : index
    %6 = vector.load %arg3[%c0_4, %c0_5] : memref<4x128xf32, #tpu.memory_space<vmem>>, vector<4x128xf32>
    %7 = vector.extract_strided_slice %6 {offsets = [0, 0], sizes = [1, 128], strides = [1, 1]} : vector<4x128xf32> to vector<1x128xf32>
    %8 = vector.shape_cast %7 : vector<1x128xf32> to vector<1x1x128xf32>
    %9 = vector.extract_strided_slice %6 {offsets = [1, 0], sizes = [1, 128], strides = [1, 1]} : vector<4x128xf32> to vector<1x128xf32>
    %10 = vector.shape_cast %9 : vector<1x128xf32> to vector<1x1x128xf32>
    %11 = vector.extract_strided_slice %6 {offsets = [2, 0], sizes = [1, 128], strides = [1, 1]} : vector<4x128xf32> to vector<1x128xf32>
    %12 = vector.shape_cast %11 : vector<1x128xf32> to vector<1x1x128xf32>
    %13 = vector.extract_strided_slice %6 {offsets = [3, 0], sizes = [1, 128], strides = [1, 1]} : vector<4x128xf32> to vector<1x128xf32>
    %14 = vector.shape_cast %13 : vector<1x128xf32> to vector<1x1x128xf32>
    %15 = vector.broadcast %8 : vector<1x1x128xf32> to vector<4x8x128xf32>
    %16 = arith.mulf %15, %5 : vector<4x8x128xf32>
    %17 = vector.broadcast %10 : vector<1x1x128xf32> to vector<4x8x128xf32>
    %18 = arith.mulf %17, %0 : vector<4x8x128xf32>
    %19 = arith.addf %16, %18 : vector<4x8x128xf32>
    %cst_6 = arith.constant dense<0.000000e+00> : vector<4x8xf32>
    %20 = vector.multi_reduction <add>, %19, %cst_6 [2] : vector<4x8x128xf32> to vector<4x8xf32>
    %21 = vector.shape_cast %20 : vector<4x8xf32> to vector<4x8x1xf32>
    %cst_7 = arith.constant 2.000000e-02 : f32
    %22 = vector.broadcast %cst_7 : f32 to vector<4x8x1xf32>
    %23 = arith.mulf %21, %22 : vector<4x8x1xf32>
    %24 = vector.broadcast %23 : vector<4x8x1xf32> to vector<4x8x128xf32>
    %25 = arith.subf %19, %24 : vector<4x8x128xf32>
    %26 = tpu.iota {dimensions = array<i32: 2>} : vector<1x1x128xi32>
    %c50_i32 = arith.constant 50 : i32
    %27 = vector.broadcast %c50_i32 : i32 to vector<1x1x128xi32>
    %28 = arith.cmpi slt, %26, %27 : vector<1x1x128xi32>
    %cst_8 = arith.constant 0.000000e+00 : f32
    %29 = vector.shape_cast %28 : vector<1x1x128xi1> to vector<1x1x128xi1>
    %30 = vector.broadcast %29 : vector<1x1x128xi1> to vector<4x8x128xi1>
    %31 = vector.broadcast %cst_8 : f32 to vector<4x8x128xf32>
    %32 = arith.select %30, %25, %31 : vector<4x8x128xi1>, vector<4x8x128xf32>
    %33 = arith.mulf %32, %32 : vector<4x8x128xf32>
    %cst_9 = arith.constant dense<0.000000e+00> : vector<4x8xf32>
    %34 = vector.multi_reduction <add>, %33, %cst_9 [2] : vector<4x8x128xf32> to vector<4x8xf32>
    %35 = vector.shape_cast %34 : vector<4x8xf32> to vector<4x8x1xf32>
    %cst_10 = arith.constant 2.000000e-02 : f32
    %36 = vector.broadcast %cst_10 : f32 to vector<4x8x1xf32>
    %37 = arith.mulf %35, %36 : vector<4x8x1xf32>
    %cst_11 = arith.constant 9.99999996E-13 : f32
    %38 = vector.broadcast %cst_11 : f32 to vector<4x8x1xf32>
    %39 = arith.addf %37, %38 : vector<4x8x1xf32>
    %40 = math.rsqrt %39 : vector<4x8x1xf32>
    %41 = vector.broadcast %40 : vector<4x8x1xf32> to vector<4x8x128xf32>
    %42 = arith.mulf %25, %41 : vector<4x8x128xf32>
    %43 = vector.broadcast %12 : vector<1x1x128xf32> to vector<4x8x128xf32>
    %44 = arith.mulf %43, %42 : vector<4x8x128xf32>
    %45 = vector.broadcast %14 : vector<1x1x128xf32> to vector<4x8x128xf32>
    %46 = arith.addf %44, %45 : vector<4x8x128xf32>
    %c0_12 = arith.constant 0 : index
    %c0_13 = arith.constant 0 : index
    %c0_14 = arith.constant 0 : index
    %47 = vector.load %arg4[%c0_12, %c0_13, %c0_14] : memref<4x8x128xf32, #tpu.memory_space<vmem>>, vector<4x8x128xf32>
    tpu.vector_store %arg4[%c0_12, %c0_13, %c0_14], %46 {strides = array<i32>} : memref<4x8x128xf32, #tpu.memory_space<vmem>>, vector<4x8x128xf32>,
    return
  }
  func.func @transform_0(%arg0: i32) -> (i32, i32, i32) {
    %c0_i32 = arith.constant 0 : i32
    %c0_i32_0 = arith.constant 0 : i32
    %c0_i32_1 = arith.constant 0 : i32
    return %arg0, %c0_i32, %c0_i32_0 : i32, i32, i32
  }
  func.func @transform_1(%arg0: i32) -> (i32, i32) {
    %c0_i32 = arith.constant 0 : i32
    %c0_i32_0 = arith.constant 0 : i32
    %c0_i32_1 = arith.constant 0 : i32
    return %c0_i32, %c0_i32_0 : i32, i32
  }
  func.func @transform_2(%arg0: i32) -> (i32, i32) {
    %c0_i32 = arith.constant 0 : i32
    %c0_i32_0 = arith.constant 0 : i32
    %c0_i32_1 = arith.constant 0 : i32
    return %c0_i32, %c0_i32_0 : i32, i32
  }
  func.func @transform_3(%arg0: i32) -> (i32, i32, i32) {
    %c0_i32 = arith.constant 0 : i32
    %c0_i32_0 = arith.constant 0 : i32
    %c0_i32_1 = arith.constant 0 : i32
    return %arg0, %c0_i32, %c0_i32_0 : i32, i32, i32
  }
}

</mosaic_0001>

<llo_original>
// kernel: _lambda_.1
$region0: #{_lambda_.1}
  #allocation0 [shape = 'u32[]', space=smem, size = 0x4, offset = 0x4, fixed_abs, tag = 'smem constant byte address 0x4 - core index']
  #allocation1 [shape = 'u32[72,128]{1,0:T(1,128)}', space=vmem, size = 0x9000, scoped, tag = 'internal scratch']
  %s0 = inlined_call_operand.vmem [shape: f32[4,8,128], index: 0, kind: input, shape index: {}]
  %s1 = inlined_call_operand.vmem [shape: f32[8,8], index: 1, kind: input, shape index: {}]
  %s2 = inlined_call_operand.vmem [shape: f32[4,128], index: 2, kind: input, shape index: {}]
  %s3 = inlined_call_operand.hbm [shape: f32[4,8,128], index: 3, kind: output, shape index: {}]
  %s4 = sld [smem:[#allocation0]]
  $region22: #{_lambda_.1} parent=0
    _
  %s6 = ssub.s32 1, %s4
  %s7 = scalar_select 0, %s6, %s4
  $region1: #{_lambda_.1} parent=0
    #allocation2 [shape = 'u8[16384]{0}', space=vmem, size = 0x4000, scoped, tag = 'output window, operand 0, single buffered']
    #allocation3 [shape = 's32[1]{0}', space=sflag, size = 0x4, scoped, tag = 'scoped memory for _lambda_.1']
    %8 = vsyncpa [#allocation3], 0
    // Predicated region
    $region2: #{_lambda_.1} parent=1 // pred_check
      _
    $region3: #{_lambda_.1} parent=1 // pred_check_branch
      %10 = sbr.rel (0) target = $region5
    $region4: #{_lambda_.1} parent=1 // pred_region
      _
    $region5: #{_lambda_.1} parent=1 // pred_fallthru
      _
    // Predicated region
    $region6: #{_lambda_.1} parent=1 // pred_check
      _
    $region7: #{_lambda_.1} parent=1 // pred_check_branch
      %12 = sbr.rel (0) target = $region9
    $region8: #{_lambda_.1} parent=1 // pred_region
      _
    $region9: #{_lambda_.1} parent=1 // pred_fallthru
      _
    // Predicated region
    $region10: #{_lambda_.1} parent=1 // pred_check
      _
    $region11: #{_lambda_.1} parent=1 // pred_check_branch
      %14 = sbr.rel (0) target = $region13
    $region12: #{_lambda_.1} parent=1 // pred_region
      _
    $region13: #{_lambda_.1} parent=1 // pred_fallthru
      _
    %v15 = vld [vmem:[%s0] sm:$0xff]
    %v16 = vld [vmem:[%s0 + $0x8] sm:$0xff]
    %v17 = vld [vmem:[%s0 + $0x10] sm:$0xff]
    %v18 = vld [vmem:[%s0 + $0x18] sm:$0xff]
    %v19 = vld [vmem:[%s1] sm:$0xff]
    %vm20 = vcmask 64512
    %v22 = vsel %vm20, %v19, 0
    %24 = vmatpush.msra.mxu0 0.0
    %25 = vmatpush.msra.mxu0 0.0
    %26 = vmatpush.msra.mxu0 0.0
    %27 = vmatpush.msra.mxu0 0.0
    %28 = vmatpush.msra.mxu0 0.0
    %29 = vmatpush.msra.mxu0 0.0
    %30 = vmatpush.msra.mxu0 0.0
    %31 = vmatpush.msra.mxu0 0.0
    %32 = vmatpush.msra.mxu0 0.0
    %33 = vmatpush.msra.mxu0 0.0
    %34 = vmatpush.msra.mxu0 0.0
    %35 = vmatpush.msra.mxu0 0.0
    %36 = vmatpush.msra.mxu0 0.0
    %37 = vmatpush.msra.mxu0 0.0
    %38 = vmatpush.msra.mxu0 0.0
    %39 = vmatpush.msra.mxu0 %v15
    %40 = vmatmul.f32.gmra.mxu0 %v22
    %v41 = vpop.f32.mrf.mxu0
    %v42 = vadd.f32 0.0, %v41
    %43 = vdwg.mxu0
    %44 = vmatpush.msra.mxu0 0.0
    %45 = vmatpush.msra.mxu0 0.0
    %46 = vmatpush.msra.mxu0 0.0
    %47 = vmatpush.msra.mxu0 0.0
    %48 = vmatpush.msra.mxu0 0.0
    %49 = vmatpush.msra.mxu0 0.0
    %50 = vmatpush.msra.mxu0 0.0
    %51 = vmatpush.msra.mxu0 0.0
    %52 = vmatpush.msra.mxu0 0.0
    %53 = vmatpush.msra.mxu0 0.0
    %54 = vmatpush.msra.mxu0 0.0
    %55 = vmatpush.msra.mxu0 0.0
    %56 = vmatpush.msra.mxu0 0.0
    %57 = vmatpush.msra.mxu0 0.0
    %58 = vmatpush.msra.mxu0 0.0
    %59 = vmatpush.msra.mxu0 %v16
    %60 = vmatmul.f32.gmra.mxu0 %v22
    %v61 = vpop.f32.mrf.mxu0
    %v62 = vadd.f32 0.0, %v61
    %63 = vdwg.mxu0
    %64 = vmatpush.msra.mxu0 0.0
    %65 = vmatpush.msra.mxu0 0.0
    %66 = vmatpush.msra.mxu0 0.0
    %67 = vmatpush.msra.mxu0 0.0
    %68 = vmatpush.msra.mxu0 0.0
    %69 = vmatpush.msra.mxu0 0.0
    %70 = vmatpush.msra.mxu0 0.0
    %71 = vmatpush.msra.mxu0 0.0
    %72 = vmatpush.msra.mxu0 0.0
    %73 = vmatpush.msra.mxu0 0.0
    %74 = vmatpush.msra.mxu0 0.0
    %75 = vmatpush.msra.mxu0 0.0
    %76 = vmatpush.msra.mxu0 0.0
    %77 = vmatpush.msra.mxu0 0.0
    %78 = vmatpush.msra.mxu0 0.0
    %79 = vmatpush.msra.mxu0 %v17
    %80 = vmatmul.f32.gmra.mxu0 %v22
    %v81 = vpop.f32.mrf.mxu0
    %v82 = vadd.f32 0.0, %v81
    %83 = vdwg.mxu0
    %84 = vmatpush.msra.mxu0 0.0
    %85 = vmatpush.msra.mxu0 0.0
    %86 = vmatpush.msra.mxu0 0.0
    %87 = vmatpush.msra.mxu0 0.0
    %88 = vmatpush.msra.mxu0 0.0
    %89 = vmatpush.msra.mxu0 0.0
    %90 = vmatpush.msra.mxu0 0.0
    %91 = vmatpush.msra.mxu0 0.0
    %92 = vmatpush.msra.mxu0 0.0
    %93 = vmatpush.msra.mxu0 0.0
    %94 = vmatpush.msra.mxu0 0.0
    %95 = vmatpush.msra.mxu0 0.0
    %96 = vmatpush.msra.mxu0 0.0
    %97 = vmatpush.msra.mxu0 0.0
    %98 = vmatpush.msra.mxu0 0.0
    %99 = vmatpush.msra.mxu0 %v18
    %100 = vmatmul.f32.gmra.mxu0 %v22
    %v101 = vpop.f32.mrf.mxu0
    %v102 = vadd.f32 0.0, %v101
    %103 = vdwg.mxu0
    %v104 = vld [vmem:[%s2] sm:$0xf]
    %v105 = vperm.slane %v104, 0
    %v106 = vmul.f32 %v105, %v42
    %v107 = vmul.f32 %v105, %v62
    %v108 = vmul.f32 %v105, %v82
    %v109 = vmul.f32 %v105, %v102
    %v110 = vperm.slane %v104, 1
    %v111 = vmul.f32 %v110, %v15
    %v112 = vmul.f32 %v110, %v16
    %v113 = vmul.f32 %v110, %v17
    %v114 = vmul.f32 %v110, %v18
    %v115 = vadd.f32 %v106, %v111
    %v116 = vadd.f32 %v107, %v112
    %v117 = vadd.f32 %v108, %v113
    %v118 = vadd.f32 %v109, %v114
    %119 = vadd.xlane.f32.xlu0 %v115
    %v120 = vpop.xlane.xlu0 %119
    %121 = vadd.xlane.f32.xlu0 %v116
    %v122 = vpop.xlane.xlu0 %121
    %123 = vadd.xlane.f32.xlu0 %v117
    %v124 = vpop.xlane.xlu0 %123
    %125 = vadd.xlane.f32.xlu0 %v118
    %v126 = vpop.xlane.xlu0 %125
    %v127 = vmul.f32 %v120, 0.02
    %v128 = vmul.f32 %v122, 0.02
    %v129 = vmul.f32 %v124, 0.02
    %v130 = vmul.f32 %v126, 0.02
    %v131 = vsub.f32 %v115, %v127
    %v132 = vsub.f32 %v116, %v128
    %v133 = vsub.f32 %v117, %v129
    %v134 = vsub.f32 %v118, %v130
    %v135 = vlaneseq
    %v136 = vand.u32 %v135, 127
    %vm137 = vcmp.lt.s32.totalorder %v136, 50
    %v138 = vsel %vm137, 1, 0
    %vm139 = vcmp.eq.s32.totalorder %v138, 1
    %v140 = vsel %vm139, %v131, 0.0
    %v141 = vsel %vm139, %v132, 0.0
    %v142 = vsel %vm139, %v133, 0.0
    %v143 = vsel %vm139, %v134, 0.0
    %v144 = vmul.f32 %v140, %v140
    %v145 = vmul.f32 %v141, %v141
    %v146 = vmul.f32 %v142, %v142
    %v147 = vmul.f32 %v143, %v143
    %148 = vadd.xlane.f32.xlu0 %v144
    %v149 = vpop.xlane.xlu0 %148
    %150 = vadd.xlane.f32.xlu0 %v145
    %v151 = vpop.xlane.xlu0 %150
    %152 = vadd.xlane.f32.xlu0 %v146
    %v153 = vpop.xlane.xlu0 %152
    %154 = vadd.xlane.f32.xlu0 %v147
    %v155 = vpop.xlane.xlu0 %154
    %v156 = vmul.f32 %v149, 0.02
    %v157 = vmul.f32 %v151, 0.02
    %v158 = vmul.f32 %v153, 0.02
    %v159 = vmul.f32 %v155, 0.02
    %v160 = vadd.f32 %v156, 1e-12
    %v161 = vadd.f32 %v157, 1e-12
    %v162 = vadd.f32 %v158, 1e-12
    %v163 = vadd.f32 %v159, 1e-12
    %v164 = vrsqrt.pop %v160
    %v165 = vmul.f32 %v164, %v160
    %v166 = vmul.f32 %v165, %v164
    %v167 = vmul.f32 0.5, %v166
    %v168 = vsub.f32 1.5, %v167
    %v169 = vmul.f32 %v164, %v168
    %vm170 = vweird.f32 %v160
    %vm171 = vweird.f32 %v164
    %vm172 = vmor %vm170, %vm171
    %v173 = vsel %vm172, %v164, %v169
    %v174 = vrsqrt.pop %v161
    %v175 = vmul.f32 %v174, %v161
    %v176 = vmul.f32 %v175, %v174
    %v177 = vmul.f32 0.5, %v176
    %v178 = vsub.f32 1.5, %v177
    %v179 = vmul.f32 %v174, %v178
    %vm180 = vweird.f32 %v161
    %vm181 = vweird.f32 %v174
    %vm182 = vmor %vm180, %vm181
    %v183 = vsel %vm182, %v174, %v179
    %v184 = vrsqrt.pop %v162
    %v185 = vmul.f32 %v184, %v162
    %v186 = vmul.f32 %v185, %v184
    %v187 = vmul.f32 0.5, %v186
    %v188 = vsub.f32 1.5, %v187
    %v189 = vmul.f32 %v184, %v188
    %vm190 = vweird.f32 %v162
    %vm191 = vweird.f32 %v184
    %vm192 = vmor %vm190, %vm191
    %v193 = vsel %vm192, %v184, %v189
    %v194 = vrsqrt.pop %v163
    %v195 = vmul.f32 %v194, %v163
    %v196 = vmul.f32 %v195, %v194
    %v197 = vmul.f32 0.5, %v196
    %v198 = vsub.f32 1.5, %v197
    %v199 = vmul.f32 %v194, %v198
    %vm200 = vweird.f32 %v163
    %vm201 = vweird.f32 %v194
    %vm202 = vmor %vm200, %vm201
    %v203 = vsel %vm202, %v194, %v199
    %v204 = vmul.f32 %v131, %v173
    %v205 = vmul.f32 %v132, %v183
    %v206 = vmul.f32 %v133, %v193
    %v207 = vmul.f32 %v134, %v203
    %v208 = vperm.slane %v104, 2
    %v209 = vmul.f32 %v208, %v204
    %v210 = vmul.f32 %v208, %v205
    %v211 = vmul.f32 %v208, %v206
    %v212 = vmul.f32 %v208, %v207
    %v213 = vperm.slane %v104, 3
    %v214 = vadd.f32 %v209, %v213
    %v215 = vadd.f32 %v210, %v213
    %v216 = vadd.f32 %v211, %v213
    %v217 = vadd.f32 %v212, %v213
    %218 = vst [vmem:[#allocation2] sm:$0xff] %v214
    %219 = vst [vmem:[#allocation2 + $0x8] sm:$0xff] %v215
    %220 = vst [vmem:[#allocation2 + $0x10] sm:$0xff] %v216
    %221 = vst [vmem:[#allocation2 + $0x18] sm:$0xff] %v217
    // Predicated region
    $region14: #{_lambda_.1} parent=1 // pred_check
      _
    $region15: #{_lambda_.1} parent=1 // pred_check_branch
      %223 = sbr.rel (0) target = $region17
    $region16: #{_lambda_.1} parent=1 // pred_region
      %225 = vsyncadd [#allocation3], 0
      %s226 = sshll.u32 [#allocation2], 4
      %s227 = int_to_ptr.vmem [resolvable:$true] %s226
      %s228 = sshll.u32 %s3, 4
      %s229 = int_to_ptr.hbm [resolvable:$true] %s228
      %234 = dma.vmem_to_hbm [thread:$0]  %s227, 512, %s229, [#allocation3], 128, 128, 8
    $region17: #{_lambda_.1} parent=1 // pred_fallthru
      _
    // Predicated region
    $region18: #{_lambda_.1} parent=1 // pred_check
      _
    $region19: #{_lambda_.1} parent=1 // pred_check_branch
      %236 = sbr.rel (0) target = $region21
    $region20: #{_lambda_.1} parent=1 // pred_region
      %238 = dma.done [#allocation3], 512
    $region21: #{_lambda_.1} parent=1 // pred_fallthru
      _
    %239 = vsyncpa [#allocation3], 1

</llo_original>
